<compile_context>
chip_gen: v7x
topology: tpu7x:2x2x1
jax: 0.10.0
libtpu: 0.0.40
codegen_flags: <defaults>
</compile_context>

<pallas_src>
import jax
import jax.numpy as jnp
from jax import lax
from jax.experimental import pallas as pl
from jax.experimental.pallas import tpu as pltpu

# ---------------- model hyper-parameters (small, synthetic) ----------------
VOCAB = 64            # text vocabulary size
HID = 32              # encoder hidden size
MEL = 32              # number of mel bins
UPS = 128             # vocoder samples per mel frame (lane-dense: >= 128)
MAX_WAV_VALUE = 32768.0

MAX_ROW_TILE = 4096   # upper bound on rows (B*T) per grid step


def _tts_kernel(tok_ref, embw1_ref, wfull_ref, bfull_ref, wav_ref):
    """Fused embedding+FFN -> vocoder -> int16 PCM.  Two matmuls total."""
    rt = tok_ref.shape[0]

    # In-kernel embedding lookup as one-hot @ (emb@w1 + b1) -- MXU-friendly,
    # no HBM-materialized [B*T, HID] activation tensor, b1 folded in.
    tok = tok_ref[...]                                          # (rt, 1) int32
    vocab_ids = lax.broadcasted_iota(jnp.int32, (rt, VOCAB), 1)
    onehot = (tok == vocab_ids).astype(jnp.bfloat16)            # (rt, VOCAB)

    # Encoder layer 1 + ReLU  (bf16 MXU path, f32 accumulate, f32 elementwise)
    h = jnp.dot(onehot, embw1_ref[...],
                preferred_element_type=jnp.float32)             # (rt, HID)
    h = jnp.maximum(h, 0.0)

    # Layer2 + mel-projection + vocoder folded into ONE matmul, then tanh,
    # scaled to PCM range.  tanh >= -1 so the floor is exactly -32768 (valid
    # int16); only the +32768 saturation case needs guarding.
    wav = jnp.tanh(
        jnp.dot(h.astype(jnp.bfloat16), wfull_ref[...],
                preferred_element_type=jnp.float32) + bfull_ref[...]
    ) * MAX_WAV_VALUE
    wav = jnp.minimum(wav, 32767.0)

    # int16 PCM written directly from the kernel (halves writeback bytes and
    # removes a separate XLA clip/cast pass).
    wav_ref[...] = wav.astype(jnp.int32).astype(jnp.int16)


def _pick_row_tile(rows, max_tile=MAX_ROW_TILE):
    """Pick a row tile that (a) is a multiple of 16 (int16 sublane packing),
    (b) keeps grid >= 2 when possible (v7x has 2 TensorCores), and
    (c) divides rows exactly when possible (no padding -> no post-slice)."""
    target = min(max_tile, max(16, rows // 2))
    target = (target // 16) * 16
    for cand in range(target, 15, -16):       # trace-time Python loop, cheap
        if rows % cand == 0:
            return cand
    return max(16, target)                    # fall back to padding


def tts_forward(tokens, params):
    """tokens: [B, T] int32  ->  int16 waveform [B, T*UPS]."""
    B, T = tokens.shape
    emb, w1, b1, w2, b2, wmel, bmel, wvoc, bvoc = params

    # -------- offline algebraic folds (all in f32, then cast for the MXU) ----
    # No nonlinearity between embedding and w1, nor between w2, wmel, wvoc.
    emb_w1 = emb @ w1 + b1                              # (VOCAB, HID)
    w2m = w2 @ wmel                                     # (HID, MEL)
    b2m = b2 @ wmel + bmel                              # (1, MEL)
    wfull = w2m @ wvoc                                  # (HID, UPS)
    bfull = b2m @ wvoc + bvoc                           # (1, UPS)

    emb_w1_bf = emb_w1.astype(jnp.bfloat16)
    wfull_bf = wfull.astype(jnp.bfloat16)

    # -------- tiling over B*T rows -------------------------------------------
    rows = B * T
    row_tile = _pick_row_tile(rows)
    rows_pad = pl.cdiv(rows, row_tile) * row_tile
    tok = tokens.reshape(-1, 1).astype(jnp.int32)
    if rows_pad != rows:
        tok = jnp.pad(tok, ((0, rows_pad - rows), (0, 0)))
    grid = (rows_pad // row_tile,)

    const2d = lambda i: (0, 0)   # weights/bias: same resident block each step

    weight_bytes = emb_w1_bf.size * 2 + wfull_bf.size * 2 + bfull.size * 4
    cost = pl.CostEstimate(
        flops=2 * rows_pad * (VOCAB * HID + HID * UPS),
        transcendentals=rows_pad * UPS,                 # tanh
        bytes_accessed=rows_pad * (4 + 2 * UPS) + weight_bytes,
    )

    wav = pl.pallas_call(
        _tts_kernel,
        out_shape=jax.ShapeDtypeStruct((rows_pad, UPS), jnp.int16),
        grid_spec=pltpu.PrefetchScalarGridSpec(
            num_scalar_prefetch=0,
            grid=grid,
            in_specs=[
                pl.BlockSpec((row_tile, 1), lambda i: (i, 0)),   # token ids
                pl.BlockSpec((VOCAB, HID), const2d),             # emb@w1+b1 bf16
                pl.BlockSpec((HID, UPS), const2d),               # folded W  bf16
                pl.BlockSpec((1, UPS), const2d),                 # folded b  f32
            ],
            out_specs=pl.BlockSpec((row_tile, UPS), lambda i: (i, 0)),
        ),
        compiler_params=pltpu.CompilerParams(
            dimension_semantics=("parallel",)),
        cost_estimate=cost,
    )(tok, emb_w1_bf, wfull_bf, bfull)

    # vocoder(mel).squeeze(1) analog: [B*T, UPS] -> [B, T*UPS] int16 PCM.
    # Slice only if padding was actually needed (usually it is not).
    if rows_pad != rows:
        wav = wav[:rows]
    return wav.reshape(B, T * UPS)


def init_params(key):
    ks = jax.random.split(key, 9)
    scale = 0.1
    emb = scale * jax.random.normal(ks[0], (VOCAB, HID), jnp.float32)
    w1 = scale * jax.random.normal(ks[1], (HID, HID), jnp.float32)
    b1 = scale * jax.random.normal(ks[2], (1, HID), jnp.float32)
    w2 = scale * jax.random.normal(ks[3], (HID, HID), jnp.float32)
    b2 = scale * jax.random.normal(ks[4], (1, HID), jnp.float32)
    wmel = scale * jax.random.normal(ks[5], (HID, MEL), jnp.float32)
    bmel = scale * jax.random.normal(ks[6], (1, MEL), jnp.float32)
    wvoc = scale * jax.random.normal(ks[7], (MEL, UPS), jnp.float32)
    bvoc = scale * jax.random.normal(ks[8], (1, UPS), jnp.float32)
    return (emb, w1, b1, w2, b2, wmel, bmel, wvoc, bvoc)


if __name__ == "__main__":
    key = jax.random.PRNGKey(0)
    pkey, tkey = jax.random.split(key)
    params = init_params(pkey)

    # Small demo shapes; rows = B*T = 512 -> row_tile 256, grid 2 (both v7x
    # TCs fed, no padding, no post-kernel slice).  For long utterances the
    # adaptive tile grows up to 4096 rows per step.
    B, T = 2, 256
    tokens = jax.random.randint(tkey, (B, T), 0, VOCAB, dtype=jnp.int32)

    # TODO(synk): real FastSpeech2 variance adaptor (duration/pitch/energy) and
    # HiFi-GAN transposed-conv stacks are replaced by a synthetic dense pipeline.
    wavs = tts_forward(tokens, params)
    jax.block_until_ready(wavs)

    assert wavs.shape == (B, T * UPS) and wavs.dtype == jnp.int16
    print("KERNEL_OK")
</pallas_src>

<mosaic_0001>
module attributes {stable_mosaic.version = 11 : i64} {
  func.func @_tts_kernel(%arg0: i32, %arg1: memref<256x1xi32, #tpu.memory_space<vmem>>, %arg2: memref<64x32xbf16, #tpu.memory_space<vmem>>, %arg3: memref<32x128xbf16, #tpu.memory_space<vmem>>, %arg4: memref<1x128xf32, #tpu.memory_space<vmem>>, %arg5: memref<256x128xi16, #tpu.memory_space<vmem>>) attributes {dimension_semantics = [#tpu.dimension_semantics<parallel>], iteration_bounds = array<i64: 2>, scalar_prefetch = 0 : i64, scratch_operands = 0 : i64, tpu.core_type = #tpu.core_type<tc>, window_params = [{transform_indices = @transform_0, window_bounds = array<i64: 256, 1>}, {pipeline_mode = #tpu.pipeline_mode<synchronous>, transform_indices = @transform_1, window_bounds = array<i64: 64, 32>}, {pipeline_mode = #tpu.pipeline_mode<synchronous>, transform_indices = @transform_2, window_bounds = array<i64: 32, 128>}, {pipeline_mode = #tpu.pipeline_mode<synchronous>, transform_indices = @transform_3, window_bounds = array<i64: 1, 128>}, {transform_indices = @transform_4, window_bounds = array<i64: 256, 128>}]} {
    %c0 = arith.constant 0 : index
    %c0_0 = arith.constant 0 : index
    %0 = vector.load %arg1[%c0, %c0_0] : memref<256x1xi32, #tpu.memory_space<vmem>>, vector<256x1xi32>
    %1 = tpu.iota {dimensions = array<i32: 1>} : vector<256x64xi32>
    %2 = vector.broadcast %0 : vector<256x1xi32> to vector<256x64xi32>
    %3 = arith.cmpi eq, %2, %1 : vector<256x64xi32>
    %4 = arith.extui %3 : vector<256x64xi1> to vector<256x64xi32>
    %5 = arith.sitofp %4 : vector<256x64xi32> to vector<256x64xf32>
    %6 = arith.truncf %5 : vector<256x64xf32> to vector<256x64xbf16>
    %c0_1 = arith.constant 0 : index
    %c0_2 = arith.constant 0 : index
    %7 = vector.load %arg2[%c0_1, %c0_2] : memref<64x32xbf16, #tpu.memory_space<vmem>>, vector<64x32xbf16>
    %cst = arith.constant dense<0.000000e+00> : vector<256x32xf32>
    %8 = tpu.matmul %6, %7, %cst {dimension_numbers = #tpu.dot_dimension_numbers<[1], [0], [0], [1], [0, 0, 1, 1], [], []>} : vector<256x64xbf16>, vector<64x32xbf16>, vector<256x32xf32> -> vector<256x32xf32>
    %cst_3 = arith.constant 0.000000e+00 : f32
    %9 = vector.broadcast %cst_3 : f32 to vector<256x32xf32>
    %10 = arith.maximumf %8, %9 : vector<256x32xf32>
    %11 = arith.truncf %10 : vector<256x32xf32> to vector<256x32xbf16>
    %c0_4 = arith.constant 0 : index
    %c0_5 = arith.constant 0 : index
    %12 = vector.load %arg3[%c0_4, %c0_5] : memref<32x128xbf16, #tpu.memory_space<vmem>>, vector<32x128xbf16>
    %cst_6 = arith.constant dense<0.000000e+00> : vector<256x128xf32>
    %13 = tpu.matmul %11, %12, %cst_6 {dimension_numbers = #tpu.dot_dimension_numbers<[1], [0], [0], [1], [0, 0, 1, 1], [], []>} : vector<256x32xbf16>, vector<32x128xbf16>, vector<256x128xf32> -> vector<256x128xf32>
    %c0_7 = arith.constant 0 : index
    %c0_8 = arith.constant 0 : index
    %14 = vector.load %arg4[%c0_7, %c0_8] : memref<1x128xf32, #tpu.memory_space<vmem>>, vector<1x128xf32>
    %15 = vector.broadcast %14 : vector<1x128xf32> to vector<256x128xf32>
    %16 = arith.addf %13, %15 : vector<256x128xf32>
    %17 = math.tanh %16 : vector<256x128xf32>
    %cst_9 = arith.constant 3.276800e+04 : f32
    %18 = vector.broadcast %cst_9 : f32 to vector<256x128xf32>
    %19 = arith.mulf %17, %18 : vector<256x128xf32>
    %cst_10 = arith.constant 3.276700e+04 : f32
    %20 = vector.broadcast %cst_10 : f32 to vector<256x128xf32>
    %21 = arith.minimumf %19, %20 : vector<256x128xf32>
    %22 = arith.fptosi %21 : vector<256x128xf32> to vector<256x128xi32>
    %23 = arith.trunci %22 : vector<256x128xi32> to vector<256x128xi16>
    %c0_11 = arith.constant 0 : index
    %c0_12 = arith.constant 0 : index
    %24 = vector.load %arg5[%c0_11, %c0_12] : memref<256x128xi16, #tpu.memory_space<vmem>>, vector<256x128xi16>
    tpu.vector_store %arg5[%c0_11, %c0_12], %23 {strides = array<i32>} : memref<256x128xi16, #tpu.memory_space<vmem>>, vector<256x128xi16>,
    return
  }
  func.func @transform_0(%arg0: i32) -> (i32, i32) {
    %c0_i32 = arith.constant 0 : i32
    %c0_i32_0 = arith.constant 0 : i32
    return %arg0, %c0_i32 : i32, i32
  }
  func.func @transform_1(%arg0: i32) -> (i32, i32) {
    %c0_i32 = arith.constant 0 : i32
    %c0_i32_0 = arith.constant 0 : i32
    %c0_i32_1 = arith.constant 0 : i32
    return %c0_i32, %c0_i32_0 : i32, i32
  }
  func.func @transform_2(%arg0: i32) -> (i32, i32) {
    %c0_i32 = arith.constant 0 : i32
    %c0_i32_0 = arith.constant 0 : i32
    %c0_i32_1 = arith.constant 0 : i32
    return %c0_i32, %c0_i32_0 : i32, i32
  }
  func.func @transform_3(%arg0: i32) -> (i32, i32) {
    %c0_i32 = arith.constant 0 : i32
    %c0_i32_0 = arith.constant 0 : i32
    %c0_i32_1 = arith.constant 0 : i32
    return %c0_i32, %c0_i32_0 : i32, i32
  }
  func.func @transform_4(%arg0: i32) -> (i32, i32) {
    %c0_i32 = arith.constant 0 : i32
    %c0_i32_0 = arith.constant 0 : i32
    return %arg0, %c0_i32 : i32, i32
  }
}

</mosaic_0001>

<llo_original>
// kernel: tpu_custom_call.1
$region0: #{tpu_custom_call.1}
  #allocation0 [shape = 'u32[]', space=smem, size = 0x4, offset = 0x4, fixed_abs, tag = 'smem constant byte address 0x4 - core index']
  #allocation1 [shape = 'u32[144,128]{1,0:T(1,128)}', space=vmem, size = 0x12000, scoped, tag = 'internal scratch']
  %s0 = inlined_call_operand.vmem [shape: s32[512,1], index: 0, kind: input, shape index: {}]
  %s1 = inlined_call_operand.vmem [shape: bf16[64,32], index: 1, kind: input, shape index: {}]
  %s2 = inlined_call_operand.vmem [shape: bf16[32,128], index: 2, kind: input, shape index: {}]
  %s3 = inlined_call_operand.vmem [shape: f32[1,128], index: 3, kind: input, shape index: {}]
  %s4 = inlined_call_operand.hbm [shape: s16[512,128], index: 4, kind: output, shape index: {}]
  %s5 = sld [smem:[#allocation0]]
  $region49: #{tpu_custom_call.1} parent=0
    _
  %s7 = ssub.s32 1, %s5
  %s8 = scalar_select 0, %s7, %s5
  $region1: #{tpu_custom_call.1} parent=0
    #allocation2 [shape = 'u8[131072]{0}', space=vmem, size = 0x20000, scoped, tag = 'output window, operand 0']
    #allocation3 [shape = 's32[2]{0}', space=sflag, size = 0x8, scoped, tag = 'scoped memory for tpu_custom_call.1']
    %9 = vsyncpa [#allocation3], 0
    %s10 = scalar_lea.sflag [#allocation3], 1
    %11 = vsyncpa %s10, 0
    loop: start=0, step=1, limit=4
    $region2: #{tpu_custom_call.1} parent=1 // loop_pre_header
      _
    $region3: #{tpu_custom_call.1} parent=1 // loop_header
      %s13 = sphi 0, %s17
      %p14 = scmp.ge.s32.totalorder %s13, 4
      %s23 = sphi 0, %s25
      %s26 = sphi 0, %s23
      %s27 = sphi 0, %s26
      %s43 = sphi 0, %s27
      %s47 = sphi 0, %s47
      %s49 = sphi 0, %s47
      %s50 = sphi 0, %s49
      %s64 = sphi 0, %s50
      %s68 = sphi 0, %s68
      %s70 = sphi 0, %s68
      %s71 = sphi 0, %s70
      %s85 = sphi 0, %s71
      %s89 = sphi 0, %s89
      %s91 = sphi 0, %s89
      %s92 = sphi 0, %s91
      %s106 = sphi 0, %s92
      %s112 = sphi 0, %s114
      %s115 = sphi 0, %s112
      %s116 = sphi 0, %s115
      %s132 = sphi 0, %s116
    $region4: #{tpu_custom_call.1} parent=1 // loop_header_branch
      %16 = sbr.rel (%p14) target = $region8
    $region5: #{tpu_custom_call.1} parent=1 // loop_body
      %s18 = ssub.s32 %s13, 1
      %s19 = ssub.s32 %s13, 2
      %s20 = sadd.s32 %s13, 1
      %s21 = ssub.s32 %s13, %s20
      %p22 = scmp.eq.s32.totalorder %s21, 0
      %s24 = sadd.s32 %s23, 1
      %s25 = scalar_select %p22, %s23, %s24
      %p28 = pneg %p22
      %p29 = scmp.eq.s32.totalorder %s13, 1
      %p30 = por %p28, %p29
      %p31 = scmp.ne.s32.totalorder %s23, %s26
      %p32 = scmp.eq.s32.totalorder %s13, 0
      %p33 = por %p31, %p32
      %p34 = scmp.ne.s32.totalorder %s23, %s26
      %p35 = scmp.eq.s32.totalorder %s18, 1
      %p36 = por %p34, %p35
      %p37 = scmp.ne.s32.totalorder %s26, %s27
      %p38 = scmp.eq.s32.totalorder %s18, 0
      %p39 = por %p37, %p38
      %p40 = scmp.ne.s32.totalorder %s26, %s27
      %p41 = scmp.eq.s32.totalorder %s19, 1
      %p42 = por %p40, %p41
      %p44 = scmp.ne.s32.totalorder %s27, %s43
      %p45 = scmp.eq.s32.totalorder %s19, 0
      %p46 = por %p44, %p45
      %s48 = sadd.s32 %s47, 1
      %p51 = scmp.eq.s32.totalorder %s13, 1
      %p52 = scmp.ne.s32.totalorder %s47, %s49
      %p53 = scmp.eq.s32.totalorder %s13, 0
      %p54 = por %p52, %p53
      %p55 = scmp.ne.s32.totalorder %s47, %s49
      %p56 = scmp.eq.s32.totalorder %s18, 1
      %p57 = por %p55, %p56
      %p58 = scmp.ne.s32.totalorder %s49, %s50
      %p59 = scmp.eq.s32.totalorder %s18, 0
      %p60 = por %p58, %p59
      %p61 = scmp.ne.s32.totalorder %s49, %s50
      %p62 = scmp.eq.s32.totalorder %s19, 1
      %p63 = por %p61, %p62
      %p65 = scmp.ne.s32.totalorder %s50, %s64
      %p66 = scmp.eq.s32.totalorder %s19, 0
      %p67 = por %p65, %p66
      %s69 = sadd.s32 %s68, 1
      %p72 = scmp.eq.s32.totalorder %s13, 1
      %p73 = scmp.ne.s32.totalorder %s68, %s70
      %p74 = scmp.eq.s32.totalorder %s13, 0
      %p75 = por %p73, %p74
      %p76 = scmp.ne.s32.totalorder %s68, %s70
      %p77 = scmp.eq.s32.totalorder %s18, 1
      %p78 = por %p76, %p77
      %p79 = scmp.ne.s32.totalorder %s70, %s71
      %p80 = scmp.eq.s32.totalorder %s18, 0
      %p81 = por %p79, %p80
      %p82 = scmp.ne.s32.totalorder %s70, %s71
      %p83 = scmp.eq.s32.totalorder %s19, 1
      %p84 = por %p82, %p83
      %p86 = scmp.ne.s32.totalorder %s71, %s85
      %p87 = scmp.eq.s32.totalorder %s19, 0
      %p88 = por %p86, %p87
      %s90 = sadd.s32 %s89, 1
      %p93 = scmp.eq.s32.totalorder %s13, 1
      %p94 = scmp.ne.s32.totalorder %s89, %s91
      %p95 = scmp.eq.s32.totalorder %s13, 0
      %p96 = por %p94, %p95
      %p97 = scmp.ne.s32.totalorder %s89, %s91
      %p98 = scmp.eq.s32.totalorder %s18, 1
      %p99 = por %p97, %p98
      %p100 = scmp.ne.s32.totalorder %s91, %s92
      %p101 = scmp.eq.s32.totalorder %s18, 0
      %p102 = por %p100, %p101
      %p103 = scmp.ne.s32.totalorder %s91, %s92
      %p104 = scmp.eq.s32.totalorder %s19, 1
      %p105 = por %p103, %p104
      %p107 = scmp.ne.s32.totalorder %s92, %s106
      %p108 = scmp.eq.s32.totalorder %s19, 0
      %p109 = por %p107, %p108
      %s110 = ssub.s32 %s13, %s20
      %p111 = scmp.eq.s32.totalorder %s110, 0
      %s113 = sadd.s32 %s112, 1
      %s114 = scalar_select %p111, %s112, %s113
      %p117 = pneg %p111
      %p118 = scmp.eq.s32.totalorder %s13, 1
      %p119 = por %p117, %p118
      %p120 = scmp.ne.s32.totalorder %s112, %s115
      %p121 = scmp.eq.s32.totalorder %s13, 0
      %p122 = por %p120, %p121
      %p123 = scmp.ne.s32.totalorder %s112, %s115
      %p124 = scmp.eq.s32.totalorder %s18, 1
      %p125 = por %p123, %p124
      %p126 = scmp.ne.s32.totalorder %s115, %s116
      %p127 = scmp.eq.s32.totalorder %s18, 0
      %p128 = por %p126, %p127
      %p129 = scmp.ne.s32.totalorder %s115, %s116
      %p130 = scmp.eq.s32.totalorder %s19, 1
      %p131 = por %p129, %p130
      %p133 = scmp.ne.s32.totalorder %s116, %s132
      %p134 = scmp.eq.s32.totalorder %s19, 0
      %p135 = por %p133, %p134
      %p136 = scmp.le.s32.totalorder 1, %s13
      %p137 = scmp.lt.s32.totalorder %s13, 3
      %p138 = pnand %p136, %p137
      %p139 = pneg %p138
      // Predicated region
      $region9: #{tpu_custom_call.1} parent=5 // pred_check
        _
      $region10: #{tpu_custom_call.1} parent=5 // pred_check_branch
        %141 = sbr.rel (%p138) target = $region12
      $region11: #{tpu_custom_call.1} parent=5 // pred_region
        %s142 = ssub.s32 %s13, 1
        // Predicated region
        $region13: #{tpu_custom_call.1} parent=11 // pred_check
          %p143 = pneg %p60
        $region14: #{tpu_custom_call.1} parent=11 // pred_check_branch
          %145 = sbr.rel (%p143) target = $region16
        $region15: #{tpu_custom_call.1} parent=11 // pred_region
          _
        $region16: #{tpu_custom_call.1} parent=11 // pred_fallthru
          _
        // Predicated region
        $region17: #{tpu_custom_call.1} parent=11 // pred_check
          %p146 = pneg %p81
        $region18: #{tpu_custom_call.1} parent=11 // pred_check_branch
          %148 = sbr.rel (%p146) target = $region20
        $region19: #{tpu_custom_call.1} parent=11 // pred_region
          _
        $region20: #{tpu_custom_call.1} parent=11 // pred_fallthru
          _
        // Predicated region
        $region21: #{tpu_custom_call.1} parent=11 // pred_check
          %p149 = pneg %p102
        $region22: #{tpu_custom_call.1} parent=11 // pred_check_branch
          %151 = sbr.rel (%p149) target = $region24
        $region23: #{tpu_custom_call.1} parent=11 // pred_region
          _
        $region24: #{tpu_custom_call.1} parent=11 // pred_fallthru
          _
      $region12: #{tpu_custom_call.1} parent=5 // pred_fallthru
        _
      %p152 = scmp.lt.s32.totalorder %s13, 2
      // Predicated region
      $region25: #{tpu_custom_call.1} parent=5 // pred_check
        %p153 = pneg %p152
      $region26: #{tpu_custom_call.1} parent=5 // pred_check_branch
        %155 = sbr.rel (%p153) target = $region28
      $region27: #{tpu_custom_call.1} parent=5 // pred_region
        // Predicated region
        $region29: #{tpu_custom_call.1} parent=27 // pred_check
          %p156 = pneg %p33
        $region30: #{tpu_custom_call.1} parent=27 // pred_check_branch
          %158 = sbr.rel (%p156) target = $region32
        $region31: #{tpu_custom_call.1} parent=27 // pred_region
          %s159 = smul.u32 32, %s13
          %p160 = scmp.lt.s32.totalorder %s159, 63
          %s161 = scalar_select %p160, %s159, 63
          %s162 = smul.addr %s161, 8
          %s163 = scalar_lea.vmem %s0, %s162
          %s164 = smul.u32 32, %s13
        $region32: #{tpu_custom_call.1} parent=27 // pred_fallthru
          _
      $region28: #{tpu_custom_call.1} parent=5 // pred_fallthru
        _
      %p165 = scmp.le.s32.totalorder 1, %s13
      %p166 = scmp.lt.s32.totalorder %s13, 3
      %p167 = pnand %p165, %p166
      %p168 = pneg %p167
      // Predicated region
      $region33: #{tpu_custom_call.1} parent=5 // pred_check
        _
      $region34: #{tpu_custom_call.1} parent=5 // pred_check_branch
        %170 = sbr.rel (%p167) target = $region36
      $region35: #{tpu_custom_call.1} parent=5 // pred_region
        %s171 = ssub.s32 %s13, 1
        %s172 = smul.u32 32, %s18
        %p173 = scmp.lt.s32.totalorder %s172, 63
        %s174 = scalar_select %p173, %s172, 63
        %s175 = smul.addr %s174, 8
        %s176 = scalar_lea.vmem %s0, %s175
        %p177 = pneg %p39
        %p178 = pneg %p36
        %p179 = pneg %p60
        %p180 = pneg %p57
        %p181 = pneg %p81
        %p182 = pneg %p78
        %p183 = pneg %p102
        %p184 = pneg %p99
        %p185 = pneg %p128
        %p186 = pneg %p125
        %s187 = sand.u32 %s115, 1
        %s188 = scalar_lea.sflag [#allocation3], %s187
        %s189 = sand.u32 %s115, 1
        %s190 = smul.addr %s189, 128
        %s191 = scalar_lea.vmem [#allocation2], %s190
        %s192 = smul.u32 32, %s18
        %p193 = scmp.lt.s32.totalorder %s192, 63
        %s194 = scalar_select %p193, %s192, 63
        %s195 = smul.addr %s194, 8
        %s196 = scalar_lea.vmem %s0, %s195
        %s197 = smul.u32 32, %s18
        %s198 = smul.u32 32, %s18
        %v200 = vld [vmem:[%s196] sm:$0xff]
        %v201 = vld [vmem:[%s196 + $0x8] sm:$0xff]
        %v202 = vld [vmem:[%s196 + $0x10] sm:$0xff]
        %v203 = vld [vmem:[%s196 + $0x18] sm:$0xff]
        %v204 = vld [vmem:[%s196 + $0x20] sm:$0xff]
        %v205 = vld [vmem:[%s196 + $0x28] sm:$0xff]
        %v206 = vld [vmem:[%s196 + $0x30] sm:$0xff]
        %v207 = vld [vmem:[%s196 + $0x38] sm:$0xff]
        %v208 = vld [vmem:[%s196 + $0x40] sm:$0xff]
        %v209 = vld [vmem:[%s196 + $0x48] sm:$0xff]
        %v210 = vld [vmem:[%s196 + $0x50] sm:$0xff]
        %v211 = vld [vmem:[%s196 + $0x58] sm:$0xff]
        %v212 = vld [vmem:[%s196 + $0x60] sm:$0xff]
        %v213 = vld [vmem:[%s196 + $0x68] sm:$0xff]
        %v214 = vld [vmem:[%s196 + $0x70] sm:$0xff]
        %v215 = vld [vmem:[%s196 + $0x78] sm:$0xff]
        %v216 = vld [vmem:[%s196 + $0x80] sm:$0xff]
        %v217 = vld [vmem:[%s196 + $0x88] sm:$0xff]
        %v218 = vld [vmem:[%s196 + $0x90] sm:$0xff]
        %v219 = vld [vmem:[%s196 + $0x98] sm:$0xff]
        %v220 = vld [vmem:[%s196 + $0xa0] sm:$0xff]
        %v221 = vld [vmem:[%s196 + $0xa8] sm:$0xff]
        %v222 = vld [vmem:[%s196 + $0xb0] sm:$0xff]
        %v223 = vld [vmem:[%s196 + $0xb8] sm:$0xff]
        %v224 = vld [vmem:[%s196 + $0xc0] sm:$0xff]
        %v225 = vld [vmem:[%s196 + $0xc8] sm:$0xff]
        %v226 = vld [vmem:[%s196 + $0xd0] sm:$0xff]
        %v227 = vld [vmem:[%s196 + $0xd8] sm:$0xff]
        %v228 = vld [vmem:[%s196 + $0xe0] sm:$0xff]
        %v229 = vld [vmem:[%s196 + $0xe8] sm:$0xff]
        %v230 = vld [vmem:[%s196 + $0xf0] sm:$0xff]
        %v231 = vld [vmem:[%s196 + $0xf8] sm:$0xff]
        %v232 = vlaneseq
        %v233 = vand.u32 %v232, 127
        %234 = vset.pattern.permute.xlu0 0
        %235 = vperm.xlu0 %234, %v200
        %v236 = vpop.permute.xlu0 %235
        %237 = vset.pattern.permute.xlu0 0
        %238 = vperm.xlu0 %237, %v201
        %v239 = vpop.permute.xlu0 %238
        %240 = vset.pattern.permute.xlu0 0
        %241 = vperm.xlu0 %240, %v202
        %v242 = vpop.permute.xlu0 %241
        %243 = vset.pattern.permute.xlu0 0
        %244 = vperm.xlu0 %243, %v203
        %v245 = vpop.permute.xlu0 %244
        %246 = vset.pattern.permute.xlu0 0
        %247 = vperm.xlu0 %246, %v204
        %v248 = vpop.permute.xlu0 %247
        %249 = vset.pattern.permute.xlu0 0
        %250 = vperm.xlu0 %249, %v205
        %v251 = vpop.permute.xlu0 %250
        %252 = vset.pattern.permute.xlu0 0
        %253 = vperm.xlu0 %252, %v206
        %v254 = vpop.permute.xlu0 %253
        %255 = vset.pattern.permute.xlu0 0
        %256 = vperm.xlu0 %255, %v207
        %v257 = vpop.permute.xlu0 %256
        %258 = vset.pattern.permute.xlu0 0
        %259 = vperm.xlu0 %258, %v208
        %v260 = vpop.permute.xlu0 %259
        %261 = vset.pattern.permute.xlu0 0
        %262 = vperm.xlu0 %261, %v209
        %v263 = vpop.permute.xlu0 %262
        %264 = vset.pattern.permute.xlu0 0
        %265 = vperm.xlu0 %264, %v210
        %v266 = vpop.permute.xlu0 %265
        %267 = vset.pattern.permute.xlu0 0
        %268 = vperm.xlu0 %267, %v211
        %v269 = vpop.permute.xlu0 %268
        %270 = vset.pattern.permute.xlu0 0
        %271 = vperm.xlu0 %270, %v212
        %v272 = vpop.permute.xlu0 %271
        %273 = vset.pattern.permute.xlu0 0
        %274 = vperm.xlu0 %273, %v213
        %v275 = vpop.permute.xlu0 %274
        %276 = vset.pattern.permute.xlu0 0
        %277 = vperm.xlu0 %276, %v214
        %v278 = vpop.permute.xlu0 %277
        %279 = vset.pattern.permute.xlu0 0
        %280 = vperm.xlu0 %279, %v215
        %v281 = vpop.permute.xlu0 %280
        %282 = vset.pattern.permute.xlu0 0
        %283 = vperm.xlu0 %282, %v216
        %v284 = vpop.permute.xlu0 %283
        %285 = vset.pattern.permute.xlu0 0
        %286 = vperm.xlu0 %285, %v217
        %v287 = vpop.permute.xlu0 %286
        %288 = vset.pattern.permute.xlu0 0
        %289 = vperm.xlu0 %288, %v218
        %v290 = vpop.permute.xlu0 %289
        %291 = vset.pattern.permute.xlu0 0
        %292 = vperm.xlu0 %291, %v219
        %v293 = vpop.permute.xlu0 %292
        %294 = vset.pattern.permute.xlu0 0
        %295 = vperm.xlu0 %294, %v220
        %v296 = vpop.permute.xlu0 %295
        %297 = vset.pattern.permute.xlu0 0
        %298 = vperm.xlu0 %297, %v221
        %v299 = vpop.permute.xlu0 %298
        %300 = vset.pattern.permute.xlu0 0
        %301 = vperm.xlu0 %300, %v222
        %v302 = vpop.permute.xlu0 %301
        %303 = vset.pattern.permute.xlu0 0
        %304 = vperm.xlu0 %303, %v223
        %v305 = vpop.permute.xlu0 %304
        %306 = vset.pattern.permute.xlu0 0
        %307 = vperm.xlu0 %306, %v224
        %v308 = vpop.permute.xlu0 %307
        %309 = vset.pattern.permute.xlu0 0
        %310 = vperm.xlu0 %309, %v225
        %v311 = vpop.permute.xlu0 %310
        %312 = vset.pattern.permute.xlu0 0
        %313 = vperm.xlu0 %312, %v226
        %v314 = vpop.permute.xlu0 %313
        %315 = vset.pattern.permute.xlu0 0
        %316 = vperm.xlu0 %315, %v227
        %v317 = vpop.permute.xlu0 %316
        %318 = vset.pattern.permute.xlu0 0
        %319 = vperm.xlu0 %318, %v228
        %v320 = vpop.permute.xlu0 %319
        %321 = vset.pattern.permute.xlu0 0
        %322 = vperm.xlu0 %321, %v229
        %v323 = vpop.permute.xlu0 %322
        %324 = vset.pattern.permute.xlu0 0
        %325 = vperm.xlu0 %324, %v230
        %v326 = vpop.permute.xlu0 %325
        %327 = vset.pattern.permute.xlu0 0
        %328 = vperm.xlu0 %327, %v231
        %v329 = vpop.permute.xlu0 %328
        %vm330 = vcmp.eq.s32.totalorder %v236, %v233
        %vm331 = vcmp.eq.s32.totalorder %v239, %v233
        %vm332 = vcmp.eq.s32.totalorder %v242, %v233
        %vm333 = vcmp.eq.s32.totalorder %v245, %v233
        %vm334 = vcmp.eq.s32.totalorder %v248, %v233
        %vm335 = vcmp.eq.s32.totalorder %v251, %v233
        %vm336 = vcmp.eq.s32.totalorder %v254, %v233
        %vm337 = vcmp.eq.s32.totalorder %v257, %v233
        %vm338 = vcmp.eq.s32.totalorder %v260, %v233
        %vm339 = vcmp.eq.s32.totalorder %v263, %v233
        %vm340 = vcmp.eq.s32.totalorder %v266, %v233
        %vm341 = vcmp.eq.s32.totalorder %v269, %v233
        %vm342 = vcmp.eq.s32.totalorder %v272, %v233
        %vm343 = vcmp.eq.s32.totalorder %v275, %v233
        %vm344 = vcmp.eq.s32.totalorder %v278, %v233
        %vm345 = vcmp.eq.s32.totalorder %v281, %v233
        %vm346 = vcmp.eq.s32.totalorder %v284, %v233
        %vm347 = vcmp.eq.s32.totalorder %v287, %v233
        %vm348 = vcmp.eq.s32.totalorder %v290, %v233
        %vm349 = vcmp.eq.s32.totalorder %v293, %v233
        %vm350 = vcmp.eq.s32.totalorder %v296, %v233
        %vm351 = vcmp.eq.s32.totalorder %v299, %v233
        %vm352 = vcmp.eq.s32.totalorder %v302, %v233
        %vm353 = vcmp.eq.s32.totalorder %v305, %v233
        %vm354 = vcmp.eq.s32.totalorder %v308, %v233
        %vm355 = vcmp.eq.s32.totalorder %v311, %v233
        %vm356 = vcmp.eq.s32.totalorder %v314, %v233
        %vm357 = vcmp.eq.s32.totalorder %v317, %v233
        %vm358 = vcmp.eq.s32.totalorder %v320, %v233
        %vm359 = vcmp.eq.s32.totalorder %v323, %v233
        %vm360 = vcmp.eq.s32.totalorder %v326, %v233
        %vm361 = vcmp.eq.s32.totalorder %v329, %v233
        %v362 = vsel %vm330, 1, 0
        %v363 = vsel %vm331, 1, 0
        %v364 = vsel %vm332, 1, 0
        %v365 = vsel %vm333, 1, 0
        %v366 = vsel %vm334, 1, 0
        %v367 = vsel %vm335, 1, 0
        %v368 = vsel %vm336, 1, 0
        %v369 = vsel %vm337, 1, 0
        %v370 = vsel %vm338, 1, 0
        %v371 = vsel %vm339, 1, 0
        %v372 = vsel %vm340, 1, 0
        %v373 = vsel %vm341, 1, 0
        %v374 = vsel %vm342, 1, 0
        %v375 = vsel %vm343, 1, 0
        %v376 = vsel %vm344, 1, 0
        %v377 = vsel %vm345, 1, 0
        %v378 = vsel %vm346, 1, 0
        %v379 = vsel %vm347, 1, 0
        %v380 = vsel %vm348, 1, 0
        %v381 = vsel %vm349, 1, 0
        %v382 = vsel %vm350, 1, 0
        %v383 = vsel %vm351, 1, 0
        %v384 = vsel %vm352, 1, 0
        %v385 = vsel %vm353, 1, 0
        %v386 = vsel %vm354, 1, 0
        %v387 = vsel %vm355, 1, 0
        %v388 = vsel %vm356, 1, 0
        %v389 = vsel %vm357, 1, 0
        %v390 = vsel %vm358, 1, 0
        %v391 = vsel %vm359, 1, 0
        %v392 = vsel %vm360, 1, 0
        %v393 = vsel %vm361, 1, 0
        %v394 = vcvt.s32.f32 %v362
        %v395 = vcvt.s32.f32 %v363
        %v396 = vcvt.s32.f32 %v364
        %v397 = vcvt.s32.f32 %v365
        %v398 = vcvt.s32.f32 %v366
        %v399 = vcvt.s32.f32 %v367
        %v400 = vcvt.s32.f32 %v368
        %v401 = vcvt.s32.f32 %v369
        %v402 = vcvt.s32.f32 %v370
        %v403 = vcvt.s32.f32 %v371
        %v404 = vcvt.s32.f32 %v372
        %v405 = vcvt.s32.f32 %v373
        %v406 = vcvt.s32.f32 %v374
        %v407 = vcvt.s32.f32 %v375
        %v408 = vcvt.s32.f32 %v376
        %v409 = vcvt.s32.f32 %v377
        %v410 = vcvt.s32.f32 %v378
        %v411 = vcvt.s32.f32 %v379
        %v412 = vcvt.s32.f32 %v380
        %v413 = vcvt.s32.f32 %v381
        %v414 = vcvt.s32.f32 %v382
        %v415 = vcvt.s32.f32 %v383
        %v416 = vcvt.s32.f32 %v384
        %v417 = vcvt.s32.f32 %v385
        %v418 = vcvt.s32.f32 %v386
        %v419 = vcvt.s32.f32 %v387
        %v420 = vcvt.s32.f32 %v388
        %v421 = vcvt.s32.f32 %v389
        %v422 = vcvt.s32.f32 %v390
        %v423 = vcvt.s32.f32 %v391
        %v424 = vcvt.s32.f32 %v392
        %v425 = vcvt.s32.f32 %v393
        %v426 = vpack.c.bf16 %v395, %v394
        %v427 = vpack.c.bf16 %v397, %v396
        %v428 = vpack.c.bf16 %v399, %v398
        %v429 = vpack.c.bf16 %v401, %v400
        %v430 = vpack.c.bf16 %v403, %v402
        %v431 = vpack.c.bf16 %v405, %v404
        %v432 = vpack.c.bf16 %v407, %v406
        %v433 = vpack.c.bf16 %v409, %v408
        %v434 = vpack.c.bf16 %v411, %v410
        %v435 = vpack.c.bf16 %v413, %v412
        %v436 = vpack.c.bf16 %v415, %v414
        %v437 = vpack.c.bf16 %v417, %v416
        %v438 = vpack.c.bf16 %v419, %v418
        %v439 = vpack.c.bf16 %v421, %v420
        %v440 = vpack.c.bf16 %v423, %v422
        %v441 = vpack.c.bf16 %v425, %v424
        %v442 = vld [vmem:[%s1] sm:$0xf]
        %v443 = vld [vmem:[%s1 + $0x4] sm:$0xf]
        %v444 = vld [vmem:[%s1 + $0x8] sm:$0xf]
        %v445 = vld [vmem:[%s1 + $0xc] sm:$0xf]
        %v446 = vld [vmem:[%s1 + $0x10] sm:$0xf]
        %v447 = vld [vmem:[%s1 + $0x14] sm:$0xf]
        %v448 = vld [vmem:[%s1 + $0x18] sm:$0xf]
        %v449 = vld [vmem:[%s1 + $0x1c] sm:$0xf]
        %v458 = vunpack.c.l.b16 %v442
        %v459 = vunpack.c.l.b16 %v443
        %v460 = vunpack.c.l.b16 %v444
        %v461 = vunpack.c.l.b16 %v445
        %v462 = vunpack.c.l.b16 %v446
        %v463 = vunpack.c.l.b16 %v447
        %v464 = vunpack.c.l.b16 %v448
        %v465 = vunpack.c.l.b16 %v449
        %v466 = vpack.c.b16 %v459, %v458
        %v467 = vpack.c.b16 %v461, %v460
        %v468 = vpack.c.b16 %v463, %v462
        %v469 = vpack.c.b16 %v465, %v464
        %vm474 = vcmask 523264
        %v476 = vsel %vm474, %v426, 0
        %v479 = vsel %vm474, %v427, 0
        %v482 = vsel %vm474, %v428, 0
        %v485 = vsel %vm474, %v429, 0
        %v488 = vsel %vm474, %v430, 0
        %v491 = vsel %vm474, %v431, 0
        %v494 = vsel %vm474, %v432, 0
        %v497 = vsel %vm474, %v433, 0
        %v500 = vsel %vm474, %v434, 0
        %v503 = vsel %vm474, %v435, 0
        %v506 = vsel %vm474, %v436, 0
        %v509 = vsel %vm474, %v437, 0
        %v512 = vsel %vm474, %v438, 0
        %v515 = vsel %vm474, %v439, 0
        %v518 = vsel %vm474, %v440, 0
        %v521 = vsel %vm474, %v441, 0
        %523 = vmatprep.subr.bf16.mxu0 0
        %524 = vmatpush1.bf16.msra.mxu0 %v466
        %525 = vmatprep.subr.bf16.mxu0 0
        %526 = vmatpush1.bf16.msra.mxu0 %v467
        %527 = vmatprep.subr.bf16.mxu0 0
        %528 = vmatpush1.bf16.msra.mxu0 %v468
        %529 = vmatprep.subr.bf16.mxu0 0
        %530 = vmatpush1.bf16.msra.mxu0 %v469
        %531 = vmatprep.subr.bf16.mxu0 0
        %532 = vmatpush1.bf16.msra.mxu0 0
        %533 = vmatprep.subr.bf16.mxu0 0
        %534 = vmatpush1.bf16.msra.mxu0 0
        %535 = vmatprep.subr.bf16.mxu0 0
        %536 = vmatpush1.bf16.msra.mxu0 0
        %537 = vmatprep.subr.bf16.mxu0 0
        %538 = vmatpush1.bf16.msra.mxu0 0
        %539 = vmatprep.subr.bf16.mxu0 0
        %540 = vmatpush1.bf16.msra.mxu0 0
        %541 = vmatprep.subr.bf16.mxu0 0
        %542 = vmatpush1.bf16.msra.mxu0 0
        %543 = vmatprep.subr.bf16.mxu0 0
        %544 = vmatpush1.bf16.msra.mxu0 0
        %545 = vmatprep.subr.bf16.mxu0 0
        %546 = vmatpush1.bf16.msra.mxu0 0
        %547 = vmatprep.subr.bf16.mxu0 0
        %548 = vmatpush1.bf16.msra.mxu0 0
        %549 = vmatprep.subr.bf16.mxu0 0
        %550 = vmatpush1.bf16.msra.mxu0 0
        %551 = vmatprep.subr.bf16.mxu0 0
        %552 = vmatpush1.bf16.msra.mxu0 0
        %553 = vmatprep.subr.bf16.mxu0 0
        %554 = vmatpush1.bf16.msra.mxu0 0
        %555 = vmatprep.mubr.bf16.mxu0 0
        %556 = vmatmul.mubr.bf16.gmra.mrb[0].mxu0 %v476
        %v557 = vpop.f32.mrb[0].mxu0
        %v558 = vadd.f32 0.0, %v557
        %v559 = vpop.f32.mrb[0].mxu0
        %v560 = vpop.f32.mrb[0].mxu0
        %v561 = vadd.f32 0.0, %v560
        %v562 = vpop.f32.mrb[0].mxu0
        %563 = vmatprep.mubr.bf16.mxu0 0
        %564 = vmatmul.mubr.bf16.gmra.mrb[0].mxu0 %v479
        %v565 = vpop.f32.mrb[0].mxu0
        %v566 = vadd.f32 0.0, %v565
        %v567 = vpop.f32.mrb[0].mxu0
        %v568 = vpop.f32.mrb[0].mxu0
        %v569 = vadd.f32 0.0, %v568
        %v570 = vpop.f32.mrb[0].mxu0
        %571 = vmatprep.mubr.bf16.mxu0 0
        %572 = vmatmul.mubr.bf16.gmra.mrb[0].mxu0 %v482
        %v573 = vpop.f32.mrb[0].mxu0
        %v574 = vadd.f32 0.0, %v573
        %v575 = vpop.f32.mrb[0].mxu0
        %v576 = vpop.f32.mrb[0].mxu0
        %v577 = vadd.f32 0.0, %v576
        %v578 = vpop.f32.mrb[0].mxu0
        %579 = vmatprep.mubr.bf16.mxu0 0
        %580 = vmatmul.mubr.bf16.gmra.mrb[0].mxu0 %v485
        %v581 = vpop.f32.mrb[0].mxu0
        %v582 = vadd.f32 0.0, %v581
        %v583 = vpop.f32.mrb[0].mxu0
        %v584 = vpop.f32.mrb[0].mxu0
        %v585 = vadd.f32 0.0, %v584
        %v586 = vpop.f32.mrb[0].mxu0
        %587 = vmatprep.mubr.bf16.mxu0 0
        %588 = vmatmul.mubr.bf16.gmra.mrb[0].mxu0 %v488
        %v589 = vpop.f32.mrb[0].mxu0
        %v590 = vadd.f32 0.0, %v589
        %v591 = vpop.f32.mrb[0].mxu0
        %v592 = vpop.f32.mrb[0].mxu0
        %v593 = vadd.f32 0.0, %v592
        %v594 = vpop.f32.mrb[0].mxu0
        %595 = vmatprep.mubr.bf16.mxu0 0
        %596 = vmatmul.mubr.bf16.gmra.mrb[0].mxu0 %v491
        %v597 = vpop.f32.mrb[0].mxu0
        %v598 = vadd.f32 0.0, %v597
        %v599 = vpop.f32.mrb[0].mxu0
        %v600 = vpop.f32.mrb[0].mxu0
        %v601 = vadd.f32 0.0, %v600
        %v602 = vpop.f32.mrb[0].mxu0
        %603 = vmatprep.mubr.bf16.mxu0 0
        %604 = vmatmul.mubr.bf16.gmra.mrb[0].mxu0 %v494
        %v605 = vpop.f32.mrb[0].mxu0
        %v606 = vadd.f32 0.0, %v605
        %v607 = vpop.f32.mrb[0].mxu0
        %v608 = vpop.f32.mrb[0].mxu0
        %v609 = vadd.f32 0.0, %v608
        %v610 = vpop.f32.mrb[0].mxu0
        %611 = vmatprep.mubr.bf16.mxu0 0
        %612 = vmatmul.mubr.bf16.gmra.mrb[0].mxu0 %v497
        %v613 = vpop.f32.mrb[0].mxu0
        %v614 = vadd.f32 0.0, %v613
        %v615 = vpop.f32.mrb[0].mxu0
        %v616 = vpop.f32.mrb[0].mxu0
        %v617 = vadd.f32 0.0, %v616
        %v618 = vpop.f32.mrb[0].mxu0
        %619 = vmatprep.mubr.bf16.mxu0 0
        %620 = vmatmul.mubr.bf16.gmra.mrb[0].mxu0 %v500
        %v621 = vpop.f32.mrb[0].mxu0
        %v622 = vadd.f32 0.0, %v621
        %v623 = vpop.f32.mrb[0].mxu0
        %v624 = vpop.f32.mrb[0].mxu0
        %v625 = vadd.f32 0.0, %v624
        %v626 = vpop.f32.mrb[0].mxu0
        %627 = vmatprep.mubr.bf16.mxu0 0
        %628 = vmatmul.mubr.bf16.gmra.mrb[0].mxu0 %v503
        %v629 = vpop.f32.mrb[0].mxu0
        %v630 = vadd.f32 0.0, %v629
        %v631 = vpop.f32.mrb[0].mxu0
        %v632 = vpop.f32.mrb[0].mxu0
        %v633 = vadd.f32 0.0, %v632
        %v634 = vpop.f32.mrb[0].mxu0
        %635 = vmatprep.mubr.bf16.mxu0 0
        %636 = vmatmul.mubr.bf16.gmra.mrb[0].mxu0 %v506
        %v637 = vpop.f32.mrb[0].mxu0
        %v638 = vadd.f32 0.0, %v637
        %v639 = vpop.f32.mrb[0].mxu0
        %v640 = vpop.f32.mrb[0].mxu0
        %v641 = vadd.f32 0.0, %v640
        %v642 = vpop.f32.mrb[0].mxu0
        %643 = vmatprep.mubr.bf16.mxu0 0
        %644 = vmatmul.mubr.bf16.gmra.mrb[0].mxu0 %v509
        %v645 = vpop.f32.mrb[0].mxu0
        %v646 = vadd.f32 0.0, %v645
        %v647 = vpop.f32.mrb[0].mxu0
        %v648 = vpop.f32.mrb[0].mxu0
        %v649 = vadd.f32 0.0, %v648
        %v650 = vpop.f32.mrb[0].mxu0
        %651 = vmatprep.mubr.bf16.mxu0 0
        %652 = vmatmul.mubr.bf16.gmra.mrb[0].mxu0 %v512
        %v653 = vpop.f32.mrb[0].mxu0
        %v654 = vadd.f32 0.0, %v653
        %v655 = vpop.f32.mrb[0].mxu0
        %v656 = vpop.f32.mrb[0].mxu0
        %v657 = vadd.f32 0.0, %v656
        %v658 = vpop.f32.mrb[0].mxu0
        %659 = vmatprep.mubr.bf16.mxu0 0
        %660 = vmatmul.mubr.bf16.gmra.mrb[0].mxu0 %v515
        %v661 = vpop.f32.mrb[0].mxu0
        %v662 = vadd.f32 0.0, %v661
        %v663 = vpop.f32.mrb[0].mxu0
        %v664 = vpop.f32.mrb[0].mxu0
        %v665 = vadd.f32 0.0, %v664
        %v666 = vpop.f32.mrb[0].mxu0
        %667 = vmatprep.mubr.bf16.mxu0 0
        %668 = vmatmul.mubr.bf16.gmra.mrb[0].mxu0 %v518
        %v669 = vpop.f32.mrb[0].mxu0
        %v670 = vadd.f32 0.0, %v669
        %v671 = vpop.f32.mrb[0].mxu0
        %v672 = vpop.f32.mrb[0].mxu0
        %v673 = vadd.f32 0.0, %v672
        %v674 = vpop.f32.mrb[0].mxu0
        %675 = vmatprep.mubr.bf16.mxu0 0
        %676 = vmatmul.mubr.bf16.gmra.mrb[0].mxu0 %v521
        %v677 = vpop.f32.mrb[0].mxu0
        %v678 = vadd.f32 0.0, %v677
        %v679 = vpop.f32.mrb[0].mxu0
        %v680 = vpop.f32.mrb[0].mxu0
        %v681 = vadd.f32 0.0, %v680
        %v682 = vpop.f32.mrb[0].mxu0
        %683 = vdwg.mxu0
        %v684 = vmax.f32 %v558, 0.0
        %v685 = vmax.f32 %v561, 0.0
        %v686 = vmax.f32 %v566, 0.0
        %v687 = vmax.f32 %v569, 0.0
        %v688 = vmax.f32 %v574, 0.0
        %v689 = vmax.f32 %v577, 0.0
        %v690 = vmax.f32 %v582, 0.0
        %v691 = vmax.f32 %v585, 0.0
        %v692 = vmax.f32 %v590, 0.0
        %v693 = vmax.f32 %v593, 0.0
        %v694 = vmax.f32 %v598, 0.0
        %v695 = vmax.f32 %v601, 0.0
        %v696 = vmax.f32 %v606, 0.0
        %v697 = vmax.f32 %v609, 0.0
        %v698 = vmax.f32 %v614, 0.0
        %v699 = vmax.f32 %v617, 0.0
        %v700 = vmax.f32 %v622, 0.0
        %v701 = vmax.f32 %v625, 0.0
        %v702 = vmax.f32 %v630, 0.0
        %v703 = vmax.f32 %v633, 0.0
        %v704 = vmax.f32 %v638, 0.0
        %v705 = vmax.f32 %v641, 0.0
        %v706 = vmax.f32 %v646, 0.0
        %v707 = vmax.f32 %v649, 0.0
        %v708 = vmax.f32 %v654, 0.0
        %v709 = vmax.f32 %v657, 0.0
        %v710 = vmax.f32 %v662, 0.0
        %v711 = vmax.f32 %v665, 0.0
        %v712 = vmax.f32 %v670, 0.0
        %v713 = vmax.f32 %v673, 0.0
        %v714 = vmax.f32 %v678, 0.0
        %v715 = vmax.f32 %v681, 0.0
        %v716 = vpack.c.bf16 %v685, %v684
        %v717 = vpack.c.bf16 %v687, %v686
        %v718 = vpack.c.bf16 %v689, %v688
        %v719 = vpack.c.bf16 %v691, %v690
        %v720 = vpack.c.bf16 %v693, %v692
        %v721 = vpack.c.bf16 %v695, %v694
        %v722 = vpack.c.bf16 %v697, %v696
        %v723 = vpack.c.bf16 %v699, %v698
        %v724 = vpack.c.bf16 %v701, %v700
        %v725 = vpack.c.bf16 %v703, %v702
        %v726 = vpack.c.bf16 %v705, %v704
        %v727 = vpack.c.bf16 %v707, %v706
        %v728 = vpack.c.bf16 %v709, %v708
        %v729 = vpack.c.bf16 %v711, %v710
        %v730 = vpack.c.bf16 %v713, %v712
        %v731 = vpack.c.bf16 %v715, %v714
        %v732 = vld [vmem:[%s2] sm:$0xf]
        %v733 = vld [vmem:[%s2 + $0x4] sm:$0xf]
        %v734 = vld [vmem:[%s2 + $0x8] sm:$0xf]
        %v735 = vld [vmem:[%s2 + $0xc] sm:$0xf]
        %v736 = vld [vmem:[%s3] sm:$0x1]
        %v738 = vlaneseq
        %v739 = vshrl.u32 %v738, 7
        %v740 = vsub.s32 0, %v739
        %v741 = vrot.slane %v736, %v740
        %v747 = vunpack.c.l.b16 %v732
        %v748 = vunpack.c.l.b16 %v733
        %v749 = vunpack.c.l.b16 %v734
        %v750 = vunpack.c.l.b16 %v735
        %v751 = vpack.c.b16 %v748, %v747
        %v752 = vpack.c.b16 %v750, %v749
        %vm755 = vcmask 261120
        %v757 = vsel %vm755, %v716, 0
        %v760 = vsel %vm755, %v717, 0
        %v763 = vsel %vm755, %v718, 0
        %v766 = vsel %vm755, %v719, 0
        %v769 = vsel %vm755, %v720, 0
        %v772 = vsel %vm755, %v721, 0
        %v775 = vsel %vm755, %v722, 0
        %v778 = vsel %vm755, %v723, 0
        %v781 = vsel %vm755, %v724, 0
        %v784 = vsel %vm755, %v725, 0
        %v787 = vsel %vm755, %v726, 0
        %v790 = vsel %vm755, %v727, 0
        %v793 = vsel %vm755, %v728, 0
        %v796 = vsel %vm755, %v729, 0
        %v799 = vsel %vm755, %v730, 0
        %v802 = vsel %vm755, %v731, 0
        %804 = vmatprep.subr.bf16.mxu0 0
        %805 = vmatpush1.bf16.msra.mxu0 %v751
        %806 = vmatprep.subr.bf16.mxu0 0
        %807 = vmatpush1.bf16.msra.mxu0 %v752
        %808 = vmatprep.subr.bf16.mxu0 0
        %809 = vmatpush1.bf16.msra.mxu0 0
        %810 = vmatprep.subr.bf16.mxu0 0
        %811 = vmatpush1.bf16.msra.mxu0 0
        %812 = vmatprep.subr.bf16.mxu0 0
        %813 = vmatpush1.bf16.msra.mxu0 0
        %814 = vmatprep.subr.bf16.mxu0 0
        %815 = vmatpush1.bf16.msra.mxu0 0
        %816 = vmatprep.subr.bf16.mxu0 0
        %817 = vmatpush1.bf16.msra.mxu0 0
        %818 = vmatprep.subr.bf16.mxu0 0
        %819 = vmatpush1.bf16.msra.mxu0 0
        %820 = vmatprep.subr.bf16.mxu0 0
        %821 = vmatpush1.bf16.msra.mxu0 0
        %822 = vmatprep.subr.bf16.mxu0 0
        %823 = vmatpush1.bf16.msra.mxu0 0
        %824 = vmatprep.subr.bf16.mxu0 0
        %825 = vmatpush1.bf16.msra.mxu0 0
        %826 = vmatprep.subr.bf16.mxu0 0
        %827 = vmatpush1.bf16.msra.mxu0 0
        %828 = vmatprep.subr.bf16.mxu0 0
        %829 = vmatpush1.bf16.msra.mxu0 0
        %830 = vmatprep.subr.bf16.mxu0 0
        %831 = vmatpush1.bf16.msra.mxu0 0
        %832 = vmatprep.subr.bf16.mxu0 0
        %833 = vmatpush1.bf16.msra.mxu0 0
        %834 = vmatprep.subr.bf16.mxu0 0
        %835 = vmatpush1.bf16.msra.mxu0 0
        %836 = vmatprep.mubr.bf16.mxu0 0
        %837 = vmatmul.mubr.bf16.gmra.mrb[0].mxu0 %v757
        %v838 = vpop.f32.mrb[0].mxu0
        %v839 = vadd.f32 %v741, %v838
        %v840 = vpop.f32.mrb[0].mxu0
        %v841 = vpop.f32.mrb[0].mxu0
        %v842 = vadd.f32 %v741, %v841
        %v843 = vpop.f32.mrb[0].mxu0
        %844 = vmatprep.mubr.bf16.mxu0 0
        %845 = vmatmul.mubr.bf16.gmra.mrb[0].mxu0 %v760
        %v846 = vpop.f32.mrb[0].mxu0
        %v847 = vadd.f32 %v741, %v846
        %v848 = vpop.f32.mrb[0].mxu0
        %v849 = vpop.f32.mrb[0].mxu0
        %v850 = vadd.f32 %v741, %v849
        %v851 = vpop.f32.mrb[0].mxu0
        %852 = vmatprep.mubr.bf16.mxu0 0
        %853 = vmatmul.mubr.bf16.gmra.mrb[0].mxu0 %v763
        %v854 = vpop.f32.mrb[0].mxu0
        %v855 = vadd.f32 %v741, %v854
        %v856 = vpop.f32.mrb[0].mxu0
        %v857 = vpop.f32.mrb[0].mxu0
        %v858 = vadd.f32 %v741, %v857
        %v859 = vpop.f32.mrb[0].mxu0
        %860 = vmatprep.mubr.bf16.mxu0 0
        %861 = vmatmul.mubr.bf16.gmra.mrb[0].mxu0 %v766
        %v862 = vpop.f32.mrb[0].mxu0
        %v863 = vadd.f32 %v741, %v862
        %v864 = vpop.f32.mrb[0].mxu0
        %v865 = vpop.f32.mrb[0].mxu0
        %v866 = vadd.f32 %v741, %v865
        %v867 = vpop.f32.mrb[0].mxu0
        %868 = vmatprep.mubr.bf16.mxu0 0
        %869 = vmatmul.mubr.bf16.gmra.mrb[0].mxu0 %v769
        %v870 = vpop.f32.mrb[0].mxu0
        %v871 = vadd.f32 %v741, %v870
        %v872 = vpop.f32.mrb[0].mxu0
        %v873 = vpop.f32.mrb[0].mxu0
        %v874 = vadd.f32 %v741, %v873
        %v875 = vpop.f32.mrb[0].mxu0
        %876 = vmatprep.mubr.bf16.mxu0 0
        %877 = vmatmul.mubr.bf16.gmra.mrb[0].mxu0 %v772
        %v878 = vpop.f32.mrb[0].mxu0
        %v879 = vadd.f32 %v741, %v878
        %v880 = vpop.f32.mrb[0].mxu0
        %v881 = vpop.f32.mrb[0].mxu0
        %v882 = vadd.f32 %v741, %v881
        %v883 = vpop.f32.mrb[0].mxu0
        %884 = vmatprep.mubr.bf16.mxu0 0
        %885 = vmatmul.mubr.bf16.gmra.mrb[0].mxu0 %v775
        %v886 = vpop.f32.mrb[0].mxu0
        %v887 = vadd.f32 %v741, %v886
        %v888 = vpop.f32.mrb[0].mxu0
        %v889 = vpop.f32.mrb[0].mxu0
        %v890 = vadd.f32 %v741, %v889
        %v891 = vpop.f32.mrb[0].mxu0
        %892 = vmatprep.mubr.bf16.mxu0 0
        %893 = vmatmul.mubr.bf16.gmra.mrb[0].mxu0 %v778
        %v894 = vpop.f32.mrb[0].mxu0
        %v895 = vadd.f32 %v741, %v894
        %v896 = vpop.f32.mrb[0].mxu0
        %v897 = vpop.f32.mrb[0].mxu0
        %v898 = vadd.f32 %v741, %v897
        %v899 = vpop.f32.mrb[0].mxu0
        %900 = vmatprep.mubr.bf16.mxu0 0
        %901 = vmatmul.mubr.bf16.gmra.mrb[0].mxu0 %v781
        %v902 = vpop.f32.mrb[0].mxu0
        %v903 = vadd.f32 %v741, %v902
        %v904 = vpop.f32.mrb[0].mxu0
        %v905 = vpop.f32.mrb[0].mxu0
        %v906 = vadd.f32 %v741, %v905
        %v907 = vpop.f32.mrb[0].mxu0
        %908 = vmatprep.mubr.bf16.mxu0 0
        %909 = vmatmul.mubr.bf16.gmra.mrb[0].mxu0 %v784
        %v910 = vpop.f32.mrb[0].mxu0
        %v911 = vadd.f32 %v741, %v910
        %v912 = vpop.f32.mrb[0].mxu0
        %v913 = vpop.f32.mrb[0].mxu0
        %v914 = vadd.f32 %v741, %v913
        %v915 = vpop.f32.mrb[0].mxu0
        %916 = vmatprep.mubr.bf16.mxu0 0
        %917 = vmatmul.mubr.bf16.gmra.mrb[0].mxu0 %v787
        %v918 = vpop.f32.mrb[0].mxu0
        %v919 = vadd.f32 %v741, %v918
        %v920 = vpop.f32.mrb[0].mxu0
        %v921 = vpop.f32.mrb[0].mxu0
        %v922 = vadd.f32 %v741, %v921
        %v923 = vpop.f32.mrb[0].mxu0
        %924 = vmatprep.mubr.bf16.mxu0 0
        %925 = vmatmul.mubr.bf16.gmra.mrb[0].mxu0 %v790
        %v926 = vpop.f32.mrb[0].mxu0
        %v927 = vadd.f32 %v741, %v926
        %v928 = vpop.f32.mrb[0].mxu0
        %v929 = vpop.f32.mrb[0].mxu0
        %v930 = vadd.f32 %v741, %v929
        %v931 = vpop.f32.mrb[0].mxu0
        %932 = vmatprep.mubr.bf16.mxu0 0
        %933 = vmatmul.mubr.bf16.gmra.mrb[0].mxu0 %v793
        %v934 = vpop.f32.mrb[0].mxu0
        %v935 = vadd.f32 %v741, %v934
        %v936 = vpop.f32.mrb[0].mxu0
        %v937 = vpop.f32.mrb[0].mxu0
        %v938 = vadd.f32 %v741, %v937
        %v939 = vpop.f32.mrb[0].mxu0
        %940 = vmatprep.mubr.bf16.mxu0 0
        %941 = vmatmul.mubr.bf16.gmra.mrb[0].mxu0 %v796
        %v942 = vpop.f32.mrb[0].mxu0
        %v943 = vadd.f32 %v741, %v942
        %v944 = vpop.f32.mrb[0].mxu0
        %v945 = vpop.f32.mrb[0].mxu0
        %v946 = vadd.f32 %v741, %v945
        %v947 = vpop.f32.mrb[0].mxu0
        %948 = vmatprep.mubr.bf16.mxu0 0
        %949 = vmatmul.mubr.bf16.gmra.mrb[0].mxu0 %v799
        %v950 = vpop.f32.mrb[0].mxu0
        %v951 = vadd.f32 %v741, %v950
        %v952 = vpop.f32.mrb[0].mxu0
        %v953 = vpop.f32.mrb[0].mxu0
        %v954 = vadd.f32 %v741, %v953
        %v955 = vpop.f32.mrb[0].mxu0
        %956 = vmatprep.mubr.bf16.mxu0 0
        %957 = vmatmul.mubr.bf16.gmra.mrb[0].mxu0 %v802
        %v958 = vpop.f32.mrb[0].mxu0
        %v959 = vadd.f32 %v741, %v958
        %v960 = vpop.f32.mrb[0].mxu0
        %v961 = vpop.f32.mrb[0].mxu0
        %v962 = vadd.f32 %v741, %v961
        %v963 = vpop.f32.mrb[0].mxu0
        %964 = vdwg.mxu0
        %v965 = vtanh.pop %v839
        %v966 = vtanh.pop %v842
        %v967 = vtanh.pop %v847
        %v968 = vtanh.pop %v850
        %v969 = vtanh.pop %v855
        %v970 = vtanh.pop %v858
        %v971 = vtanh.pop %v863
        %v972 = vtanh.pop %v866
        %v973 = vtanh.pop %v871
        %v974 = vtanh.pop %v874
        %v975 = vtanh.pop %v879
        %v976 = vtanh.pop %v882
        %v977 = vtanh.pop %v887
        %v978 = vtanh.pop %v890
        %v979 = vtanh.pop %v895
        %v980 = vtanh.pop %v898
        %v981 = vtanh.pop %v903
        %v982 = vtanh.pop %v906
        %v983 = vtanh.pop %v911
        %v984 = vtanh.pop %v914
        %v985 = vtanh.pop %v919
        %v986 = vtanh.pop %v922
        %v987 = vtanh.pop %v927
        %v988 = vtanh.pop %v930
        %v989 = vtanh.pop %v935
        %v990 = vtanh.pop %v938
        %v991 = vtanh.pop %v943
        %v992 = vtanh.pop %v946
        %v993 = vtanh.pop %v951
        %v994 = vtanh.pop %v954
        %v995 = vtanh.pop %v959
        %v996 = vtanh.pop %v962
        %v997 = vmul.f32 %v965, 32768.0
        %v998 = vmul.f32 %v966, 32768.0
        %v999 = vmul.f32 %v967, 32768.0
        %v1000 = vmul.f32 %v968, 32768.0
        %v1001 = vmul.f32 %v969, 32768.0
        %v1002 = vmul.f32 %v970, 32768.0
        %v1003 = vmul.f32 %v971, 32768.0
        %v1004 = vmul.f32 %v972, 32768.0
        %v1005 = vmul.f32 %v973, 32768.0
        %v1006 = vmul.f32 %v974, 32768.0
        %v1007 = vmul.f32 %v975, 32768.0
        %v1008 = vmul.f32 %v976, 32768.0
        %v1009 = vmul.f32 %v977, 32768.0
        %v1010 = vmul.f32 %v978, 32768.0
        %v1011 = vmul.f32 %v979, 32768.0
        %v1012 = vmul.f32 %v980, 32768.0
        %v1013 = vmul.f32 %v981, 32768.0
        %v1014 = vmul.f32 %v982, 32768.0
        %v1015 = vmul.f32 %v983, 32768.0
        %v1016 = vmul.f32 %v984, 32768.0
        %v1017 = vmul.f32 %v985, 32768.0
        %v1018 = vmul.f32 %v986, 32768.0
        %v1019 = vmul.f32 %v987, 32768.0
        %v1020 = vmul.f32 %v988, 32768.0
        %v1021 = vmul.f32 %v989, 32768.0
        %v1022 = vmul.f32 %v990, 32768.0
        %v1023 = vmul.f32 %v991, 32768.0
        %v1024 = vmul.f32 %v992, 32768.0
        %v1025 = vmul.f32 %v993, 32768.0
        %v1026 = vmul.f32 %v994, 32768.0
        %v1027 = vmul.f32 %v995, 32768.0
        %v1028 = vmul.f32 %v996, 32768.0
        %v1029 = vmin.f32 %v997, 32767.0
        %v1030 = vmin.f32 %v998, 32767.0
        %v1031 = vmin.f32 %v999, 32767.0
        %v1032 = vmin.f32 %v1000, 32767.0
        %v1033 = vmin.f32 %v1001, 32767.0
        %v1034 = vmin.f32 %v1002, 32767.0
        %v1035 = vmin.f32 %v1003, 32767.0
        %v1036 = vmin.f32 %v1004, 32767.0
        %v1037 = vmin.f32 %v1005, 32767.0
        %v1038 = vmin.f32 %v1006, 32767.0
        %v1039 = vmin.f32 %v1007, 32767.0
        %v1040 = vmin.f32 %v1008, 32767.0
        %v1041 = vmin.f32 %v1009, 32767.0
        %v1042 = vmin.f32 %v1010, 32767.0
        %v1043 = vmin.f32 %v1011, 32767.0
        %v1044 = vmin.f32 %v1012, 32767.0
        %v1045 = vmin.f32 %v1013, 32767.0
        %v1046 = vmin.f32 %v1014, 32767.0
        %v1047 = vmin.f32 %v1015, 32767.0
        %v1048 = vmin.f32 %v1016, 32767.0
        %v1049 = vmin.f32 %v1017, 32767.0
        %v1050 = vmin.f32 %v1018, 32767.0
        %v1051 = vmin.f32 %v1019, 32767.0
        %v1052 = vmin.f32 %v1020, 32767.0
        %v1053 = vmin.f32 %v1021, 32767.0
        %v1054 = vmin.f32 %v1022, 32767.0
        %v1055 = vmin.f32 %v1023, 32767.0
        %v1056 = vmin.f32 %v1024, 32767.0
        %v1057 = vmin.f32 %v1025, 32767.0
        %v1058 = vmin.f32 %v1026, 32767.0
        %v1059 = vmin.f32 %v1027, 32767.0
        %v1060 = vmin.f32 %v1028, 32767.0
        %v1061 = vcvt.f32.s32.to.zero.pseudo %v1029
        %v1062 = vcvt.f32.s32.to.zero.pseudo %v1030
        %v1063 = vcvt.f32.s32.to.zero.pseudo %v1031
        %v1064 = vcvt.f32.s32.to.zero.pseudo %v1032
        %v1065 = vcvt.f32.s32.to.zero.pseudo %v1033
        %v1066 = vcvt.f32.s32.to.zero.pseudo %v1034
        %v1067 = vcvt.f32.s32.to.zero.pseudo %v1035
        %v1068 = vcvt.f32.s32.to.zero.pseudo %v1036
        %v1069 = vcvt.f32.s32.to.zero.pseudo %v1037
        %v1070 = vcvt.f32.s32.to.zero.pseudo %v1038
        %v1071 = vcvt.f32.s32.to.zero.pseudo %v1039
        %v1072 = vcvt.f32.s32.to.zero.pseudo %v1040
        %v1073 = vcvt.f32.s32.to.zero.pseudo %v1041
        %v1074 = vcvt.f32.s32.to.zero.pseudo %v1042
        %v1075 = vcvt.f32.s32.to.zero.pseudo %v1043
        %v1076 = vcvt.f32.s32.to.zero.pseudo %v1044
        %v1077 = vcvt.f32.s32.to.zero.pseudo %v1045
        %v1078 = vcvt.f32.s32.to.zero.pseudo %v1046
        %v1079 = vcvt.f32.s32.to.zero.pseudo %v1047
        %v1080 = vcvt.f32.s32.to.zero.pseudo %v1048
        %v1081 = vcvt.f32.s32.to.zero.pseudo %v1049
        %v1082 = vcvt.f32.s32.to.zero.pseudo %v1050
        %v1083 = vcvt.f32.s32.to.zero.pseudo %v1051
        %v1084 = vcvt.f32.s32.to.zero.pseudo %v1052
        %v1085 = vcvt.f32.s32.to.zero.pseudo %v1053
        %v1086 = vcvt.f32.s32.to.zero.pseudo %v1054
        %v1087 = vcvt.f32.s32.to.zero.pseudo %v1055
        %v1088 = vcvt.f32.s32.to.zero.pseudo %v1056
        %v1089 = vcvt.f32.s32.to.zero.pseudo %v1057
        %v1090 = vcvt.f32.s32.to.zero.pseudo %v1058
        %v1091 = vcvt.f32.s32.to.zero.pseudo %v1059
        %v1092 = vcvt.f32.s32.to.zero.pseudo %v1060
        %v1093 = vpack.c.b16 %v1061, %v1061
        %v1094 = vpack.c.b16 %v1062, %v1062
        %v1095 = vpack.c.b16 %v1063, %v1063
        %v1096 = vpack.c.b16 %v1064, %v1064
        %v1097 = vpack.c.b16 %v1065, %v1065
        %v1098 = vpack.c.b16 %v1066, %v1066
        %v1099 = vpack.c.b16 %v1067, %v1067
        %v1100 = vpack.c.b16 %v1068, %v1068
        %v1101 = vpack.c.b16 %v1069, %v1069
        %v1102 = vpack.c.b16 %v1070, %v1070
        %v1103 = vpack.c.b16 %v1071, %v1071
        %v1104 = vpack.c.b16 %v1072, %v1072
        %v1105 = vpack.c.b16 %v1073, %v1073
        %v1106 = vpack.c.b16 %v1074, %v1074
        %v1107 = vpack.c.b16 %v1075, %v1075
        %v1108 = vpack.c.b16 %v1076, %v1076
        %v1109 = vpack.c.b16 %v1077, %v1077
        %v1110 = vpack.c.b16 %v1078, %v1078
        %v1111 = vpack.c.b16 %v1079, %v1079
        %v1112 = vpack.c.b16 %v1080, %v1080
        %v1113 = vpack.c.b16 %v1081, %v1081
        %v1114 = vpack.c.b16 %v1082, %v1082
        %v1115 = vpack.c.b16 %v1083, %v1083
        %v1116 = vpack.c.b16 %v1084, %v1084
        %v1117 = vpack.c.b16 %v1085, %v1085
        %v1118 = vpack.c.b16 %v1086, %v1086
        %v1119 = vpack.c.b16 %v1087, %v1087
        %v1120 = vpack.c.b16 %v1088, %v1088
        %v1121 = vpack.c.b16 %v1089, %v1089
        %v1122 = vpack.c.b16 %v1090, %v1090
        %v1123 = vpack.c.b16 %v1091, %v1091
        %v1124 = vpack.c.b16 %v1092, %v1092
        %1125 = vst [vmem:[%s191] sm:$0xf] %v1093
        %1126 = vst [vmem:[%s191 + $0x4] sm:$0xf] %v1094
        %1127 = vst [vmem:[%s191 + $0x8] sm:$0xf] %v1095
        %1128 = vst [vmem:[%s191 + $0xc] sm:$0xf] %v1096
        %1129 = vst [vmem:[%s191 + $0x10] sm:$0xf] %v1097
        %1130 = vst [vmem:[%s191 + $0x14] sm:$0xf] %v1098
        %1131 = vst [vmem:[%s191 + $0x18] sm:$0xf] %v1099
        %1132 = vst [vmem:[%s191 + $0x1c] sm:$0xf] %v1100
        %1133 = vst [vmem:[%s191 + $0x20] sm:$0xf] %v1101
        %1134 = vst [vmem:[%s191 + $0x24] sm:$0xf] %v1102
        %1135 = vst [vmem:[%s191 + $0x28] sm:$0xf] %v1103
        %1136 = vst [vmem:[%s191 + $0x2c] sm:$0xf] %v1104
        %1137 = vst [vmem:[%s191 + $0x30] sm:$0xf] %v1105
        %1138 = vst [vmem:[%s191 + $0x34] sm:$0xf] %v1106
        %1139 = vst [vmem:[%s191 + $0x38] sm:$0xf] %v1107
        %1140 = vst [vmem:[%s191 + $0x3c] sm:$0xf] %v1108
        %1141 = vst [vmem:[%s191 + $0x40] sm:$0xf] %v1109
        %1142 = vst [vmem:[%s191 + $0x44] sm:$0xf] %v1110
        %1143 = vst [vmem:[%s191 + $0x48] sm:$0xf] %v1111
        %1144 = vst [vmem:[%s191 + $0x4c] sm:$0xf] %v1112
        %1145 = vst [vmem:[%s191 + $0x50] sm:$0xf] %v1113
        %1146 = vst [vmem:[%s191 + $0x54] sm:$0xf] %v1114
        %1147 = vst [vmem:[%s191 + $0x58] sm:$0xf] %v1115
        %1148 = vst [vmem:[%s191 + $0x5c] sm:$0xf] %v1116
        %1149 = vst [vmem:[%s191 + $0x60] sm:$0xf] %v1117
        %1150 = vst [vmem:[%s191 + $0x64] sm:$0xf] %v1118
        %1151 = vst [vmem:[%s191 + $0x68] sm:$0xf] %v1119
        %1152 = vst [vmem:[%s191 + $0x6c] sm:$0xf] %v1120
        %1153 = vst [vmem:[%s191 + $0x70] sm:$0xf] %v1121
        %1154 = vst [vmem:[%s191 + $0x74] sm:$0xf] %v1122
        %1155 = vst [vmem:[%s191 + $0x78] sm:$0xf] %v1123
        %1156 = vst [vmem:[%s191 + $0x7c] sm:$0xf] %v1124
        %s1157 = sand.u32 %s115, 1
        %s1158 = scalar_lea.sflag [#allocation3], %s1157
        %s1159 = sand.u32 %s115, 1
        %s1160 = smul.addr %s1159, 128
        %s1161 = scalar_lea.vmem [#allocation2], %s1160
        // Predicated region
        $region37: #{tpu_custom_call.1} parent=35 // pred_check
          %p1162 = pneg %p125
        $region38: #{tpu_custom_call.1} parent=35 // pred_check_branch
          %1164 = sbr.rel (%p1162) target = $region40
        $region39: #{tpu_custom_call.1} parent=35 // pred_region
          %s1165 = smul.u32 32, %s18
          %s1167 = ssub.s32 2048, 2048
          %1168 = vsyncadd %s1158, %s1167
          %s1169 = smul.addr %s1165, 64
          %s1170 = scalar_lea.hbm %s4, %s1169
          %s1171 = sshll.u32 %s1161, 4
          %s1172 = int_to_ptr.vmem [resolvable:$true] %s1171
          %1177 = dma.vmem_to_hbm [thread:$0]  %s1172, 2048, %s1170, %s1158, 64, 64, 4
        $region40: #{tpu_custom_call.1} parent=35 // pred_fallthru
          _
      $region36: #{tpu_custom_call.1} parent=5 // pred_fallthru
        _
      %p1178 = scmp.le.s32.totalorder 2, %s13
      // Predicated region
      $region41: #{tpu_custom_call.1} parent=5 // pred_check
        %p1179 = pneg %p1178
      $region42: #{tpu_custom_call.1} parent=5 // pred_check_branch
        %1181 = sbr.rel (%p1179) target = $region44
      $region43: #{tpu_custom_call.1} parent=5 // pred_region
        %s1182 = ssub.s32 %s13, 2
        // Predicated region
        $region45: #{tpu_custom_call.1} parent=43 // pred_check
          %p1183 = pneg %p131
        $region46: #{tpu_custom_call.1} parent=43 // pred_check_branch
          %1185 = sbr.rel (%p1183) target = $region48
        $region47: #{tpu_custom_call.1} parent=43 // pred_region
          %s1186 = sand.u32 %s116, 1
          %s1187 = scalar_lea.sflag [#allocation3], %s1186
          %s1188 = sand.u32 %s116, 1
          %s1189 = smul.addr %s1188, 128
          %s1190 = scalar_lea.vmem [#allocation2], %s1189
          %1191 = dma.done %s1187, 2048
        $region48: #{tpu_custom_call.1} parent=43 // pred_fallthru
          _
      $region44: #{tpu_custom_call.1} parent=5 // pred_fallthru
        _
    $region6: #{tpu_custom_call.1} parent=1 // loop_footer
      %s17 = sadd.s32 1, %s13
    $region7: #{tpu_custom_call.1} parent=1 // loop_footer_branch
      %12 = sbr.rel target = $region3
    $region8: #{tpu_custom_call.1} parent=1 // loop_exit
      _
    %1192 = vsyncpa [#allocation3], 1
    %s1193 = scalar_lea.sflag [#allocation3], 1
    %1194 = vsyncpa %s1193, 1

</llo_original>
